<compile_context>
chip_gen: v5e
topology: v5e:2x2
jax: 0.10.0
libtpu: 0.0.40
codegen_flags: <defaults>
</compile_context>

<pallas_src>
import functools

import jax
import jax.numpy as jnp
from jax.experimental import pallas as pl
from jax.experimental.pallas import tpu as pltpu


def _compute_vmem_limit():
    # v7x has only 64 MiB VMEM per TensorCore; leave headroom for compiler
    # scratch / double buffers. v5e/v6e (128 MiB) get capped at 100 MiB.
    try:
        cap = int(pltpu.get_tpu_info().vmem_capacity_bytes)
    except Exception:
        cap = 64 * 1024 * 1024
    return max(32 * 1024 * 1024, min(cap - 8 * 1024 * 1024, 100 * 1024 * 1024))


_VMEM_LIMIT = _compute_vmem_limit()


def _round_up(x, m):
    return (x + m - 1) // m * m


def _pick_divisor(n, candidates):
    for c in candidates:
        if n % c == 0:
            return c
    return n


# ----------------------------- Pallas kernels ------------------------------

def _matmul_fused_kernel(a_ref, b_ref, scale_ref, bias_ref, *rest,
                         relu, has_residual):
    if has_residual:
        res_ref, o_ref, acc_ref = rest
    else:
        o_ref, acc_ref = rest

    @pl.when(pl.program_id(2) == 0)
    def _():
        acc_ref[...] = jnp.zeros_like(acc_ref)

    acc_ref[...] += jnp.dot(a_ref[...], b_ref[...],
                            preferred_element_type=jnp.float32)

    @pl.when(pl.program_id(2) == pl.num_programs(2) - 1)
    def _():
        acc = acc_ref[...] * scale_ref[...] + bias_ref[...]
        if has_residual:
            acc = acc + res_ref[...].astype(jnp.float32)
        if relu:
            acc = jnp.maximum(acc, 0.0)
        o_ref[...] = acc.astype(o_ref.dtype)


def matmul_fused(a, b, scale, bias, *, relu=False, residual=None,
                 out_dtype=jnp.bfloat16):
    """maybe_relu((a @ b) * scale + bias [+ residual]); scale/bias per column.

    bf16 MXU inputs, f32 accumulation, K-streamed grid with (M, N) tiles
    marked 'parallel' for megacore sharding. Inputs are zero-padded up to the
    tile grid and the result is sliced back to (M, N).
    """
    M, K = a.shape
    K2, N = b.shape
    assert K == K2

    tm = min(256, _round_up(M, 8))
    tn = min(256, _round_up(N, 128))
    Mp = _round_up(M, tm)
    Np = _round_up(N, tn)
    Kp = _round_up(K, 128)
    tk = _pick_divisor(Kp, (512, 384, 256, 128))

    a_p = a.astype(jnp.bfloat16)
    if (Mp, Kp) != (M, K):
        a_p = jnp.pad(a_p, ((0, Mp - M), (0, Kp - K)))
    b_p = b.astype(jnp.bfloat16)
    if (Kp, Np) != (K, N):
        b_p = jnp.pad(b_p, ((0, Kp - K), (0, Np - N)))
    scale_p = jnp.pad(scale.astype(jnp.float32).reshape(N),
                      (0, Np - N)).reshape(1, Np)
    bias_p = jnp.pad(bias.astype(jnp.float32).reshape(N),
                     (0, Np - N)).reshape(1, Np)

    operands = [a_p, b_p, scale_p, bias_p]
    in_specs = [
        pl.BlockSpec((tm, tk), lambda i, j, k: (i, k)),
        pl.BlockSpec((tk, tn), lambda i, j, k: (k, j)),
        pl.BlockSpec((1, tn), lambda i, j, k: (0, j)),
        pl.BlockSpec((1, tn), lambda i, j, k: (0, j)),
    ]
    has_residual = residual is not None
    if has_residual:
        r_p = residual.astype(jnp.bfloat16)
        if (Mp, Np) != (M, N):
            r_p = jnp.pad(r_p, ((0, Mp - M), (0, Np - N)))
        operands.append(r_p)
        in_specs.append(pl.BlockSpec((tm, tn), lambda i, j, k: (i, j)))

    out = pl.pallas_call(
        functools.partial(_matmul_fused_kernel, relu=relu,
                          has_residual=has_residual),
        out_shape=jax.ShapeDtypeStruct((Mp, Np), out_dtype),
        grid_spec=pltpu.PrefetchScalarGridSpec(
            num_scalar_prefetch=0,
            grid=(Mp // tm, Np // tn, Kp // tk),
            in_specs=in_specs,
            out_specs=pl.BlockSpec((tm, tn), lambda i, j, k: (i, j)),
            scratch_shapes=[pltpu.VMEM((tm, tn), jnp.float32)]),
        compiler_params=pltpu.CompilerParams(
            dimension_semantics=("parallel", "parallel", "arbitrary"),
            vmem_limit_bytes=_VMEM_LIMIT),
    )(*operands)

    if (Mp, Np) != (M, N):
        out = out[:M, :N]
    return out


def _reduce_lead_kernel(x_ref, o_ref, *, op):
    x = x_ref[...]
    if op == "max":
        o_ref[...] = jnp.max(x, axis=0).astype(o_ref.dtype)
    else:
        o_ref[...] = jnp.mean(x.astype(jnp.float32), axis=0).astype(o_ref.dtype)


def reduce_leading(x, op, out_dtype=None):
    """x: (R, M, C) -> (M, C); max/mean over the leading axis, tiled over M."""
    R, M, C = x.shape
    out_dtype = out_dtype if out_dtype is not None else x.dtype
    tm = _pick_divisor(M, (1024, 512, 256, 128, 64, 32, 16, 8))
    return pl.pallas_call(
        functools.partial(_reduce_lead_kernel, op=op),
        out_shape=jax.ShapeDtypeStruct((M, C), out_dtype),
        grid_spec=pltpu.PrefetchScalarGridSpec(
            num_scalar_prefetch=0,
            grid=(M // tm,),
            in_specs=[pl.BlockSpec((R, tm, C), lambda i: (0, i, 0))],
            out_specs=pl.BlockSpec((tm, C), lambda i: (i, 0))),
        compiler_params=pltpu.CompilerParams(
            dimension_semantics=("parallel",),
            vmem_limit_bytes=_VMEM_LIMIT),
    )(x)


def _spatial_mean_kernel(x_ref, o_ref):
    o_ref[...] = jnp.mean(x_ref[...].astype(jnp.float32),
                          axis=1).astype(o_ref.dtype)


def spatial_mean(x, out_dtype=jnp.bfloat16):
    """x: (N, HW, C) -> (N, C); mean over axis 1 (no transpose needed)."""
    N, HW, C = x.shape
    bn = _pick_divisor(N, (256, 128, 64, 32, 16, 8))
    return pl.pallas_call(
        _spatial_mean_kernel,
        out_shape=jax.ShapeDtypeStruct((N, C), out_dtype),
        grid_spec=pltpu.PrefetchScalarGridSpec(
            num_scalar_prefetch=0,
            grid=(N // bn,),
            in_specs=[pl.BlockSpec((bn, HW, C), lambda i: (i, 0, 0))],
            out_specs=pl.BlockSpec((bn, C), lambda i: (i, 0))),
        compiler_params=pltpu.CompilerParams(
            dimension_semantics=("parallel",),
            vmem_limit_bytes=_VMEM_LIMIT),
    )(x)


def _lstm_step_kernel(gx_ref, whh_ref, out_ref, h_sc, c_sc, *, hidden):
    @pl.when(pl.program_id(0) == 0)
    def _():
        h_sc[...] = jnp.zeros_like(h_sc)
        c_sc[...] = jnp.zeros_like(c_sc)

    h = h_sc[...]                      # (b, H) f32
    c = c_sc[...]                      # (b, H) f32
    # Input projection (x @ W_ih^T + b_ih + b_hh) was hoisted out; only the
    # recurrent matmul runs per step (bf16 MXU, f32 accumulation).
    gates = gx_ref[0] + jnp.dot(h.astype(jnp.bfloat16), whh_ref[...],
                                preferred_element_type=jnp.float32)
    # PyTorch LSTM gate order: input, forget, cell, output.
    i = jax.nn.sigmoid(gates[:, 0 * hidden:1 * hidden])
    f = jax.nn.sigmoid(gates[:, 1 * hidden:2 * hidden])
    g = jnp.tanh(gates[:, 2 * hidden:3 * hidden])
    o = jax.nn.sigmoid(gates[:, 3 * hidden:4 * hidden])
    c_new = f * c + i * g
    h_new = o * jnp.tanh(c_new)
    c_sc[...] = c_new
    h_sc[...] = h_new
    out_ref[0] = h_new


def lstm_forward(x_seq, w_ih, w_hh, b_ih, b_hh):
    """x_seq: (b, t, feat) -> all hidden states (t, b, hidden); h0 = c0 = 0."""
    b, t, feat = x_seq.shape
    hidden = w_hh.shape[1]
    bias = (b_ih + b_hh).astype(jnp.float32)

    # Hoisted input projection: one well-shaped GEMM over all b*t rows.
    gates_x = matmul_fused(x_seq.reshape(b * t, feat), jnp.transpose(w_ih),
                           jnp.ones((4 * hidden,), jnp.float32), bias,
                           relu=False, out_dtype=jnp.float32)   # (b*t, 4H)
    gx = jnp.transpose(gates_x.reshape(b, t, 4 * hidden), (1, 0, 2))  # (t,b,4H)
    whh_t = jnp.transpose(w_hh).astype(jnp.bfloat16)                  # (H, 4H)

    return pl.pallas_call(
        functools.partial(_lstm_step_kernel, hidden=hidden),
        out_shape=jax.ShapeDtypeStruct((t, b, hidden), jnp.float32),
        grid_spec=pltpu.PrefetchScalarGridSpec(
            num_scalar_prefetch=0,
            grid=(t,),
            in_specs=[pl.BlockSpec((1, b, 4 * hidden), lambda s: (s, 0, 0)),
                      pl.BlockSpec((hidden, 4 * hidden), lambda s: (0, 0))],
            out_specs=pl.BlockSpec((1, b, hidden), lambda s: (s, 0, 0)),
            scratch_shapes=[pltpu.VMEM((b, hidden), jnp.float32),
                            pltpu.VMEM((b, hidden), jnp.float32)]),
        compiler_params=pltpu.CompilerParams(
            dimension_semantics=("arbitrary",),
            vmem_limit_bytes=_VMEM_LIMIT),
    )(gx, whh_t)


# ------------------------------- conv glue ---------------------------------

def _im2col(x, kh, kw, stride, padding):
    """Pure data movement (pad + strided slices + concat); GEMM is in Pallas.

    TODO(synk): patches are still materialized in HBM by XLA (now in bf16,
                halving traffic); a fully streamed per-tap K loop inside the
                GEMM would avoid the kh*kw activation re-read entirely.
    """
    N, H, W, C = x.shape
    if padding > 0:
        x = jnp.pad(x, ((0, 0), (padding, padding), (padding, padding), (0, 0)))
    Ho = (H + 2 * padding - kh) // stride + 1
    Wo = (W + 2 * padding - kw) // stride + 1
    cols = []
    for dy in range(kh):
        for dx in range(kw):
            cols.append(x[:, dy:dy + (Ho - 1) * stride + 1:stride,
                          dx:dx + (Wo - 1) * stride + 1:stride, :])
    patches = cols[0] if len(cols) == 1 else jnp.concatenate(cols, axis=-1)
    return patches.reshape(N * Ho * Wo, kh * kw * C), Ho, Wo


def conv_bn(x, w, scale, bias, *, stride, padding, relu, residual=None):
    """Conv2d (no bias) + folded eval-mode BN (+ optional residual + ReLU)."""
    N = x.shape[0]
    O, I, kh, kw = w.shape
    A, Ho, Wo = _im2col(x, kh, kw, stride, padding)
    B = jnp.transpose(w, (2, 3, 1, 0)).reshape(kh * kw * I, O)  # (dy,dx,cin,cout)
    res2d = None
    if residual is not None:
        res2d = residual.reshape(N * Ho * Wo, O)
    out = matmul_fused(A, B, scale, bias, relu=relu, residual=res2d,
                       out_dtype=jnp.bfloat16)
    return out.reshape(N, Ho, Wo, O)


def maxpool_3x3_s2_p1(x):
    N, H, W, C = x.shape
    xp = jnp.pad(x, ((0, 0), (1, 1), (1, 1), (0, 0)),
                 constant_values=-jnp.inf)
    Ho = (H + 2 - 3) // 2 + 1
    Wo = (W + 2 - 3) // 2 + 1
    slices = [xp[:, dy:dy + (Ho - 1) * 2 + 1:2, dx:dx + (Wo - 1) * 2 + 1:2, :]
              for dy in range(3) for dx in range(3)]
    stacked = jnp.stack(slices, axis=0).reshape(9, N * Ho * Wo, C)
    return reduce_leading(stacked, "max").reshape(N, Ho, Wo, C)


# --------------------------- parameter generation --------------------------

class ParamGen:
    def __init__(self, key):
        self._key = key

    def _next(self):
        self._key, k = jax.random.split(self._key)
        return k

    def conv(self, out_c, in_c, kh, kw):
        fan_in = in_c * kh * kw
        return jax.random.normal(self._next(), (out_c, in_c, kh, kw),
                                 jnp.float32) * jnp.sqrt(2.0 / fan_in)

    def bn(self, c, eps=1e-5):
        gamma = jax.random.uniform(self._next(), (c,), jnp.float32, 0.5, 1.5)
        beta = 0.1 * jax.random.normal(self._next(), (c,), jnp.float32)
        running_mean = 0.1 * jax.random.normal(self._next(), (c,), jnp.float32)
        running_var = jax.random.uniform(self._next(), (c,), jnp.float32, 0.5, 1.5)
        scale = gamma / jnp.sqrt(running_var + eps)
        bias = beta - running_mean * scale
        return scale, bias

    def linear(self, out_f, in_f):
        bound = 1.0 / (in_f ** 0.5)
        w = jax.random.uniform(self._next(), (out_f, in_f), jnp.float32, -bound, bound)
        b = jax.random.uniform(self._next(), (out_f,), jnp.float32, -bound, bound)
        return w, b

    def lstm(self, input_size, hidden):
        bound = 1.0 / (hidden ** 0.5)
        w_ih = jax.random.uniform(self._next(), (4 * hidden, input_size), jnp.float32, -bound, bound)
        w_hh = jax.random.uniform(self._next(), (4 * hidden, hidden), jnp.float32, -bound, bound)
        b_ih = jax.random.uniform(self._next(), (4 * hidden,), jnp.float32, -bound, bound)
        b_hh = jax.random.uniform(self._next(), (4 * hidden,), jnp.float32, -bound, bound)
        return w_ih, w_hh, b_ih, b_hh


def make_bottleneck_params(gen, in_c, planes, stride):
    p = {
        "conv1": gen.conv(planes, in_c, 1, 1), "bn1": gen.bn(planes),
        "conv2": gen.conv(planes, planes, 3, 3), "bn2": gen.bn(planes),
        "conv3": gen.conv(planes * 4, planes, 1, 1), "bn3": gen.bn(planes * 4),
        "stride": stride,
    }
    if stride != 1 or in_c != planes * 4:
        p["down_conv"] = gen.conv(planes * 4, in_c, 1, 1)
        p["down_bn"] = gen.bn(planes * 4)
    return p


def make_params(key, num_classes, hidden_dim=512, feat_dim=2048):
    gen = ParamGen(key)
    base = {"conv1": gen.conv(64, 3, 7, 7), "bn1": gen.bn(64), "layers": []}
    in_c = 64
    for planes, blocks, stride in [(64, 3, 1), (128, 4, 2), (256, 6, 2), (512, 3, 2)]:
        layer = []
        for bi in range(blocks):
            s = stride if bi == 0 else 1
            layer.append(make_bottleneck_params(gen, in_c, planes, s))
            in_c = planes * 4
        base["layers"].append(layer)
    return {
        "base": base,
        "lstm": gen.lstm(feat_dim, hidden_dim),
        "classifier": gen.linear(num_classes, hidden_dim),
        "hidden_dim": hidden_dim,
    }


# ------------------------------ model forward ------------------------------

def bottleneck_forward(x, p):
    if "down_conv" in p:
        identity = conv_bn(x, p["down_conv"], *p["down_bn"],
                           stride=p["stride"], padding=0, relu=False)
    else:
        identity = x
    out = conv_bn(x, p["conv1"], *p["bn1"], stride=1, padding=0, relu=True)
    out = conv_bn(out, p["conv2"], *p["bn2"], stride=p["stride"], padding=1, relu=True)
    # Residual add + ReLU fused into the conv3 GEMM epilogue.
    out = conv_bn(out, p["conv3"], *p["bn3"], stride=1, padding=0, relu=True,
                  residual=identity)
    return out


def resnet50_base_forward(x, base):
    x = conv_bn(x, base["conv1"], *base["bn1"], stride=2, padding=3, relu=True)
    x = maxpool_3x3_s2_p1(x)
    for layer in base["layers"]:
        for blk in layer:
            x = bottleneck_forward(x, blk)
    return x  # (N, Hf, Wf, 2048) bf16


def resnet50rnn_forward(x, params):
    """x: (b, t, 3, H, W) float32 (NCHW frames, as in the PyTorch module)."""
    b, t, c, H, W = x.shape
    xb = jnp.transpose(x.reshape(b * t, c, H, W), (0, 2, 3, 1)).astype(jnp.bfloat16)
    feat = resnet50_base_forward(xb, params["base"])             # (b*t, Hf, Wf, 2048)
    N, Hf, Wf, C = feat.shape
    # F.avg_pool2d over the full spatial extent == mean over (Hf, Wf);
    # reduced in-kernel over axis 1 (no transpose).
    pooled = spatial_mean(feat.reshape(N, Hf * Wf, C))           # (b*t, 2048)
    xseq = pooled.reshape(b, t, C)
    hs = lstm_forward(xseq, *params["lstm"])                     # (t, b, hidden) f32
    # output.permute(0,2,1) + F.avg_pool1d(., t) == mean over time.
    f = reduce_leading(hs, "mean", out_dtype=jnp.float32)        # (b, hidden) f32
    wc, bc = params["classifier"]
    # Classifier GEMM: N (=num_classes) is padded to 128 lanes inside
    # matmul_fused and sliced back afterwards.
    y = matmul_fused(f, wc.T, jnp.ones((wc.shape[0],), jnp.float32), bc,
                     relu=False, out_dtype=jnp.float32)
    return y, f


# ---------------------------------- main ------------------------------------

if __name__ == "__main__":
    key = jax.random.PRNGKey(0)
    pkey, xkey = jax.random.split(key)

    num_classes = 10
    b, t, H, W = 2, 4, 64, 64          # small shapes consistent with (b, t, 3, H, W)

    params = make_params(pkey, num_classes)
    x = jax.random.normal(xkey, (b, t, 3, H, W), jnp.float32)

    y, f = resnet50rnn_forward(x, params)
    jax.block_until_ready((y, f))

    assert y.shape == (b, num_classes), y.shape
    assert f.shape == (b, params["hidden_dim"]), f.shape
    assert bool(jnp.all(jnp.isfinite(y))) and bool(jnp.all(jnp.isfinite(f)))
    print("KERNEL_OK")
</pallas_src>

<mosaic_0001>
module attributes {stable_mosaic.version = 11 : i64} {
  func.func @_matmul_fused_kernel(%arg0: i32, %arg1: i32, %arg2: i32, %arg3: memref<256x256xbf16, #tpu.memory_space<vmem>>, %arg4: memref<256x128xbf16, #tpu.memory_space<vmem>>, %arg5: memref<1x128xf32, #tpu.memory_space<vmem>>, %arg6: memref<1x128xf32, #tpu.memory_space<vmem>>, %arg7: memref<256x128xbf16, #tpu.memory_space<vmem>>, %arg8: memref<256x128xf32, #tpu.memory_space<vmem>>) attributes {dimension_semantics = [#tpu.dimension_semantics<parallel>, #tpu.dimension_semantics<parallel>, #tpu.dimension_semantics<arbitrary>], iteration_bounds = array<i64: 32, 1, 1>, scalar_prefetch = 0 : i64, scratch_operands = 1 : i64, tpu.core_type = #tpu.core_type<tc>, window_params = [{transform_indices = @transform_0, window_bounds = array<i64: 256, 256>}, {transform_indices = @transform_1, window_bounds = array<i64: 256, 128>}, {transform_indices = @transform_2, window_bounds = array<i64: 1, 128>}, {transform_indices = @transform_3, window_bounds = array<i64: 1, 128>}, {transform_indices = @transform_4, window_bounds = array<i64: 256, 128>}]} {
    %c0_i32 = arith.constant 0 : i32
    %0 = arith.cmpi eq, %arg2, %c0_i32 : i32
    %1 = arith.extui %0 : i1 to i32
    %c0_i32_0 = arith.constant 0 : i32
    %2 = arith.cmpi ne, %1, %c0_i32_0 : i32
    scf.if %2 {
      %cst_10 = arith.constant 0.000000e+00 : f32
      %12 = vector.broadcast %cst_10 : f32 to vector<256x128xf32>
      %c0_11 = arith.constant 0 : index
      %c0_12 = arith.constant 0 : index
      %13 = vector.load %arg8[%c0_11, %c0_12] : memref<256x128xf32, #tpu.memory_space<vmem>>, vector<256x128xf32>
      tpu.vector_store %arg8[%c0_11, %c0_12], %12 {strides = array<i32>} : memref<256x128xf32, #tpu.memory_space<vmem>>, vector<256x128xf32>,
    } else {
    }
    %c0 = arith.constant 0 : index
    %c0_1 = arith.constant 0 : index
    %3 = vector.load %arg8[%c0, %c0_1] : memref<256x128xf32, #tpu.memory_space<vmem>>, vector<256x128xf32>
    %c0_2 = arith.constant 0 : index
    %c0_3 = arith.constant 0 : index
    %4 = vector.load %arg3[%c0_2, %c0_3] : memref<256x256xbf16, #tpu.memory_space<vmem>>, vector<256x256xbf16>
    %c0_4 = arith.constant 0 : index
    %c0_5 = arith.constant 0 : index
    %5 = vector.load %arg4[%c0_4, %c0_5] : memref<256x128xbf16, #tpu.memory_space<vmem>>, vector<256x128xbf16>
    %cst = arith.constant dense<0.000000e+00> : vector<256x128xf32>
    %6 = tpu.matmul %4, %5, %cst {dimension_numbers = #tpu.dot_dimension_numbers<[1], [0], [0], [1], [0, 0, 1, 1], [], []>} : vector<256x256xbf16>, vector<256x128xbf16>, vector<256x128xf32> -> vector<256x128xf32>
    %7 = arith.addf %3, %6 : vector<256x128xf32>
    %c0_6 = arith.constant 0 : index
    %c0_7 = arith.constant 0 : index
    %8 = vector.load %arg8[%c0_6, %c0_7] : memref<256x128xf32, #tpu.memory_space<vmem>>, vector<256x128xf32>
    tpu.vector_store %arg8[%c0_6, %c0_7], %7 {strides = array<i32>} : memref<256x128xf32, #tpu.memory_space<vmem>>, vector<256x128xf32>,
    %c0_i32_8 = arith.constant 0 : i32
    %9 = arith.cmpi eq, %arg2, %c0_i32_8 : i32
    %10 = arith.extui %9 : i1 to i32
    %c0_i32_9 = arith.constant 0 : i32
    %11 = arith.cmpi ne, %10, %c0_i32_9 : i32
    scf.if %11 {
      %c0_10 = arith.constant 0 : index
      %c0_11 = arith.constant 0 : index
      %12 = vector.load %arg8[%c0_10, %c0_11] : memref<256x128xf32, #tpu.memory_space<vmem>>, vector<256x128xf32>
      %c0_12 = arith.constant 0 : index
      %c0_13 = arith.constant 0 : index
      %13 = vector.load %arg5[%c0_12, %c0_13] : memref<1x128xf32, #tpu.memory_space<vmem>>, vector<1x128xf32>
      %14 = vector.broadcast %13 : vector<1x128xf32> to vector<256x128xf32>
      %15 = arith.mulf %12, %14 : vector<256x128xf32>
      %c0_14 = arith.constant 0 : index
      %c0_15 = arith.constant 0 : index
      %16 = vector.load %arg6[%c0_14, %c0_15] : memref<1x128xf32, #tpu.memory_space<vmem>>, vector<1x128xf32>
      %17 = vector.broadcast %16 : vector<1x128xf32> to vector<256x128xf32>
      %18 = arith.addf %15, %17 : vector<256x128xf32>
      %cst_16 = arith.constant 0.000000e+00 : f32
      %19 = vector.broadcast %cst_16 : f32 to vector<256x128xf32>
      %20 = arith.maximumf %18, %19 : vector<256x128xf32>
      %21 = arith.truncf %20 : vector<256x128xf32> to vector<256x128xbf16>
      %c0_17 = arith.constant 0 : index
      %c0_18 = arith.constant 0 : index
      %22 = vector.load %arg7[%c0_17, %c0_18] : memref<256x128xbf16, #tpu.memory_space<vmem>>, vector<256x128xbf16>
      tpu.vector_store %arg7[%c0_17, %c0_18], %21 {strides = array<i32>} : memref<256x128xbf16, #tpu.memory_space<vmem>>, vector<256x128xbf16>,
    } else {
    }
    return
  }
  func.func @transform_0(%arg0: i32, %arg1: i32, %arg2: i32) -> (i32, i32) {
    %c0_i32 = arith.constant 0 : i32
    return %arg0, %arg2 : i32, i32
  }
  func.func @transform_1(%arg0: i32, %arg1: i32, %arg2: i32) -> (i32, i32) {
    %c0_i32 = arith.constant 0 : i32
    return %arg2, %arg1 : i32, i32
  }
  func.func @transform_2(%arg0: i32, %arg1: i32, %arg2: i32) -> (i32, i32) {
    %c0_i32 = arith.constant 0 : i32
    %c0_i32_0 = arith.constant 0 : i32
    return %c0_i32, %arg1 : i32, i32
  }
  func.func @transform_3(%arg0: i32, %arg1: i32, %arg2: i32) -> (i32, i32) {
    %c0_i32 = arith.constant 0 : i32
    %c0_i32_0 = arith.constant 0 : i32
    return %c0_i32, %arg1 : i32, i32
  }
  func.func @transform_4(%arg0: i32, %arg1: i32, %arg2: i32) -> (i32, i32) {
    %c0_i32 = arith.constant 0 : i32
    return %arg0, %arg1 : i32, i32
  }
}

</mosaic_0001>

<llo_original>
// kernel: tpu_custom_call.1
$region0: #{tpu_custom_call.1}
  #allocation0 [shape = 'u32[]', space=smem, size = 0x4, offset = 0x4, fixed_abs, tag = 'smem constant byte address 0x4 - core index']
  #allocation1 [shape = 'u32[72,128]{1,0:T(1,128)}', space=vmem, size = 0x9000, scoped, tag = 'internal scratch']
  #allocation2 [shape = 'f32[256,128]{1,0:T(8,128)}', space=vmem, size = 0x20000, scoped, tag = 'scratch operand']
  %s0 = inlined_call_operand.hbm [shape: bf16[8192,256], index: 0, kind: input, shape index: {}]
  %s1 = inlined_call_operand.hbm [shape: bf16[256,128], index: 1, kind: input, shape index: {}]
  %s2 = inlined_call_operand.hbm [shape: f32[1,128], index: 2, kind: input, shape index: {}]
  %s3 = inlined_call_operand.hbm [shape: f32[1,128], index: 3, kind: input, shape index: {}]
  %s4 = inlined_call_operand.hbm [shape: bf16[8192,128], index: 4, kind: output, shape index: {}]
  %s5 = sld [smem:[#allocation0]]
  $region73: #{tpu_custom_call.1} parent=0
    _
  %s7 = ssub.s32 1, %s5
  %s8 = scalar_select 0, %s7, %s5
  $region1: #{tpu_custom_call.1} parent=0
    #allocation3 [shape = 'u8[262144]{0}', space=vmem, size = 0x40000, scoped, tag = 'input window, operand 0']
    #allocation4 [shape = 's32[2]{0}', space=sflag, size = 0x8, scoped, tag = 'scoped memory for tpu_custom_call.1']
    #allocation5 [shape = 's32[2]{0}', space=sflag, size = 0x8, scoped, tag = 'scoped memory for tpu_custom_call.1']
    #allocation6 [shape = 'u8[65536]{0}', space=vmem, size = 0x10000, scoped, tag = 'input window, operand 1, single buffered']
    #allocation7 [shape = 's32[1]{0}', space=sflag, size = 0x4, scoped, tag = 'scoped memory for tpu_custom_call.1']
    #allocation8 [shape = 'u8[512]{0}', space=vmem, size = 0x400, scoped, tag = 'input window, operand 2, single buffered']
    #allocation9 [shape = 'u8[512]{0}', space=vmem, size = 0x400, scoped, tag = 'input window, operand 3, single buffered']
    #allocation10 [shape = 's32[1]{0}', space=sflag, size = 0x4, scoped, tag = 'scoped memory for tpu_custom_call.1']
    #allocation11 [shape = 'u8[131072]{0}', space=vmem, size = 0x20000, scoped, tag = 'output window, operand 0']
    %9 = vsyncpa [#allocation4], 0
    %s10 = scalar_lea.sflag [#allocation4], 1
    %11 = vsyncpa %s10, 0
    %12 = vsyncpa [#allocation7], 0
    %13 = vsyncpa [#allocation10], 0
    %14 = vsyncpa [#allocation5], 0
    %s15 = scalar_lea.sflag [#allocation5], 1
    %16 = vsyncpa %s15, 0
    loop: start=0, step=1, limit=34
    $region2: #{tpu_custom_call.1} parent=1 // loop_pre_header
      _
    $region3: #{tpu_custom_call.1} parent=1 // loop_header
      %s18 = sphi 0, %s22
      %p19 = scmp.ge.s32.totalorder %s18, 34
      %s25 = sphi 0, %s44
      %s26 = sphi 0, %s40
      %s27 = sphi 0, %s36
      %s28 = sphi 0, %s25
      %s29 = sphi 0, %s26
      %s30 = sphi 0, %s27
      %s31 = sphi 0, %s28
      %s32 = sphi 0, %s29
      %s33 = sphi 0, %s30
      %s49 = sphi 0, %s51
      %s52 = sphi 0, %s49
      %s53 = sphi 0, %s52
      %s69 = sphi 0, %s53
      %s77 = sphi 0, %s79
      %s80 = sphi 0, %s77
      %s81 = sphi 0, %s80
      %s97 = sphi 0, %s81
      %s103 = sphi 0, %s105
      %s106 = sphi 0, %s103
      %s107 = sphi 0, %s106
      %s123 = sphi 0, %s107
      %s129 = sphi 0, %s131
      %s132 = sphi 0, %s129
      %s133 = sphi 0, %s132
      %s149 = sphi 0, %s133
      %s157 = sphi 0, %s159
      %s160 = sphi 0, %s157
      %s161 = sphi 0, %s160
      %s177 = sphi 0, %s161
    $region4: #{tpu_custom_call.1} parent=1 // loop_header_branch
      %21 = sbr.rel (%p19) target = $region8
    $region5: #{tpu_custom_call.1} parent=1 // loop_body
      %s23 = ssub.s32 %s18, 1
      %s24 = ssub.s32 %s18, 2
      %s34 = sadd.s32 1, %s27
      %p35 = scmp.ge.s32.totalorder %s34, 1
      %s36 = scalar_select %p35, 0, %s34
      %s37 = sadd.s32 1, %s26
      %s38 = scalar_select %p35, %s37, %s26
      %p39 = scmp.ge.s32.totalorder %s38, 1
      %s40 = scalar_select %p39, 0, %s38
      %s41 = sadd.s32 1, %s25
      %s42 = scalar_select %p39, %s41, %s25
      %p43 = scmp.ge.s32.totalorder %s42, 32
      %s44 = scalar_select %p43, 0, %s42
      %s45 = ssub.s32 %s25, %s44
      %s46 = ssub.s32 %s27, %s36
      %s47 = sor.u32 %s45, %s46
      %p48 = scmp.eq.s32.totalorder %s47, 0
      %s50 = sadd.s32 %s49, 1
      %s51 = scalar_select %p48, %s49, %s50
      %p54 = pneg %p48
      %p55 = scmp.eq.s32.totalorder %s18, 31
      %p56 = por %p54, %p55
      %p57 = scmp.ne.s32.totalorder %s49, %s52
      %p58 = scmp.eq.s32.totalorder %s18, 0
      %p59 = por %p57, %p58
      %p60 = scmp.ne.s32.totalorder %s49, %s52
      %p61 = scmp.eq.s32.totalorder %s23, 31
      %p62 = por %p60, %p61
      %p63 = scmp.ne.s32.totalorder %s52, %s53
      %p64 = scmp.eq.s32.totalorder %s23, 0
      %p65 = por %p63, %p64
      %p66 = scmp.ne.s32.totalorder %s52, %s53
      %p67 = scmp.eq.s32.totalorder %s24, 31
      %p68 = por %p66, %p67
      %p70 = scmp.ne.s32.totalorder %s53, %s69
      %p71 = scmp.eq.s32.totalorder %s24, 0
      %p72 = por %p70, %p71
      %s73 = ssub.s32 %s27, %s36
      %s74 = ssub.s32 %s26, %s40
      %s75 = sor.u32 %s73, %s74
      %p76 = scmp.eq.s32.totalorder %s75, 0
      %s78 = sadd.s32 %s77, 1
      %s79 = scalar_select %p76, %s77, %s78
      %p82 = pneg %p76
      %p83 = scmp.eq.s32.totalorder %s18, 31
      %p84 = por %p82, %p83
      %p85 = scmp.ne.s32.totalorder %s77, %s80
      %p86 = scmp.eq.s32.totalorder %s18, 0
      %p87 = por %p85, %p86
      %p88 = scmp.ne.s32.totalorder %s77, %s80
      %p89 = scmp.eq.s32.totalorder %s23, 31
      %p90 = por %p88, %p89
      %p91 = scmp.ne.s32.totalorder %s80, %s81
      %p92 = scmp.eq.s32.totalorder %s23, 0
      %p93 = por %p91, %p92
      %p94 = scmp.ne.s32.totalorder %s80, %s81
      %p95 = scmp.eq.s32.totalorder %s24, 31
      %p96 = por %p94, %p95
      %p98 = scmp.ne.s32.totalorder %s81, %s97
      %p99 = scmp.eq.s32.totalorder %s24, 0
      %p100 = por %p98, %p99
      %s101 = ssub.s32 %s26, %s40
      %p102 = scmp.eq.s32.totalorder %s101, 0
      %s104 = sadd.s32 %s103, 1
      %s105 = scalar_select %p102, %s103, %s104
      %p108 = pneg %p102
      %p109 = scmp.eq.s32.totalorder %s18, 31
      %p110 = por %p108, %p109
      %p111 = scmp.ne.s32.totalorder %s103, %s106
      %p112 = scmp.eq.s32.totalorder %s18, 0
      %p113 = por %p111, %p112
      %p114 = scmp.ne.s32.totalorder %s103, %s106
      %p115 = scmp.eq.s32.totalorder %s23, 31
      %p116 = por %p114, %p115
      %p117 = scmp.ne.s32.totalorder %s106, %s107
      %p118 = scmp.eq.s32.totalorder %s23, 0
      %p119 = por %p117, %p118
      %p120 = scmp.ne.s32.totalorder %s106, %s107
      %p121 = scmp.eq.s32.totalorder %s24, 31
      %p122 = por %p120, %p121
      %p124 = scmp.ne.s32.totalorder %s107, %s123
      %p125 = scmp.eq.s32.totalorder %s24, 0
      %p126 = por %p124, %p125
      %s127 = ssub.s32 %s26, %s40
      %p128 = scmp.eq.s32.totalorder %s127, 0
      %s130 = sadd.s32 %s129, 1
      %s131 = scalar_select %p128, %s129, %s130
      %p134 = pneg %p128
      %p135 = scmp.eq.s32.totalorder %s18, 31
      %p136 = por %p134, %p135
      %p137 = scmp.ne.s32.totalorder %s129, %s132
      %p138 = scmp.eq.s32.totalorder %s18, 0
      %p139 = por %p137, %p138
      %p140 = scmp.ne.s32.totalorder %s129, %s132
      %p141 = scmp.eq.s32.totalorder %s23, 31
      %p142 = por %p140, %p141
      %p143 = scmp.ne.s32.totalorder %s132, %s133
      %p144 = scmp.eq.s32.totalorder %s23, 0
      %p145 = por %p143, %p144
      %p146 = scmp.ne.s32.totalorder %s132, %s133
      %p147 = scmp.eq.s32.totalorder %s24, 31
      %p148 = por %p146, %p147
      %p150 = scmp.ne.s32.totalorder %s133, %s149
      %p151 = scmp.eq.s32.totalorder %s24, 0
      %p152 = por %p150, %p151
      %s153 = ssub.s32 %s25, %s44
      %s154 = ssub.s32 %s26, %s40
      %s155 = sor.u32 %s153, %s154
      %p156 = scmp.eq.s32.totalorder %s155, 0
      %s158 = sadd.s32 %s157, 1
      %s159 = scalar_select %p156, %s157, %s158
      %p162 = pneg %p156
      %p163 = scmp.eq.s32.totalorder %s18, 31
      %p164 = por %p162, %p163
      %p165 = scmp.ne.s32.totalorder %s157, %s160
      %p166 = scmp.eq.s32.totalorder %s18, 0
      %p167 = por %p165, %p166
      %p168 = scmp.ne.s32.totalorder %s157, %s160
      %p169 = scmp.eq.s32.totalorder %s23, 31
      %p170 = por %p168, %p169
      %p171 = scmp.ne.s32.totalorder %s160, %s161
      %p172 = scmp.eq.s32.totalorder %s23, 0
      %p173 = por %p171, %p172
      %p174 = scmp.ne.s32.totalorder %s160, %s161
      %p175 = scmp.eq.s32.totalorder %s24, 31
      %p176 = por %p174, %p175
      %p178 = scmp.ne.s32.totalorder %s161, %s177
      %p179 = scmp.eq.s32.totalorder %s24, 0
      %p180 = por %p178, %p179
      %p181 = scmp.le.s32.totalorder 1, %s18
      %p182 = scmp.lt.s32.totalorder %s18, 33
      %p183 = pnand %p181, %p182
      %p184 = pneg %p183
      // Predicated region
      $region9: #{tpu_custom_call.1} parent=5 // pred_check
        _
      $region10: #{tpu_custom_call.1} parent=5 // pred_check_branch
        %186 = sbr.rel (%p183) target = $region12
      $region11: #{tpu_custom_call.1} parent=5 // pred_region
        %s187 = ssub.s32 %s18, 1
        // Predicated region
        $region13: #{tpu_custom_call.1} parent=11 // pred_check
          %p188 = pneg %p93
        $region14: #{tpu_custom_call.1} parent=11 // pred_check_branch
          %190 = sbr.rel (%p188) target = $region16
        $region15: #{tpu_custom_call.1} parent=11 // pred_region
          %s191 = smul.u32 32, %s30
          %193 = vsyncadd [#allocation7], 0
          %s194 = sadd.s32 %s29, %s191
          %s195 = smul.addr %s194, 4
          %s196 = scalar_lea.hbm %s1, %s195
          %s197 = sshll.u32 %s196, 4
          %s198 = int_to_ptr.hbm [resolvable:$true] %s197
          %s199 = sshll.u32 [#allocation6], 4
          %s200 = int_to_ptr.vmem [resolvable:$true] %s199
          %205 = dma.hbm_to_vmem [thread:$0]  %s198, 2048, %s200, [#allocation7], 64, 64, 4
        $region16: #{tpu_custom_call.1} parent=11 // pred_fallthru
          _
        // Predicated region
        $region17: #{tpu_custom_call.1} parent=11 // pred_check
          %p206 = pneg %p119
        $region18: #{tpu_custom_call.1} parent=11 // pred_check_branch
          %208 = sbr.rel (%p206) target = $region20
        $region19: #{tpu_custom_call.1} parent=11 // pred_region
          %210 = vsyncadd [#allocation7], 0
          %s211 = scalar_lea.hbm %s2, %s29
          %s213 = sshll.u32 %s211, 4
          %s214 = int_to_ptr.hbm [resolvable:$true] %s213
          %s215 = sshll.u32 [#allocation8], 4
          %s216 = int_to_ptr.vmem [resolvable:$true] %s215
          %218 = dma.hbm_to_vmem [thread:$0]  %s214, 16, %s216, [#allocation7]
        $region20: #{tpu_custom_call.1} parent=11 // pred_fallthru
          _
        // Predicated region
        $region21: #{tpu_custom_call.1} parent=11 // pred_check
          %p219 = pneg %p145
        $region22: #{tpu_custom_call.1} parent=11 // pred_check_branch
          %221 = sbr.rel (%p219) target = $region24
        $region23: #{tpu_custom_call.1} parent=11 // pred_region
          %223 = vsyncadd [#allocation10], 0
          %s224 = scalar_lea.hbm %s3, %s29
          %s226 = sshll.u32 %s224, 4
          %s227 = int_to_ptr.hbm [resolvable:$true] %s226
          %s228 = sshll.u32 [#allocation9], 4
          %s229 = int_to_ptr.vmem [resolvable:$true] %s228
          %231 = dma.hbm_to_vmem [thread:$0]  %s227, 16, %s229, [#allocation10]
        $region24: #{tpu_custom_call.1} parent=11 // pred_fallthru
          _
      $region12: #{tpu_custom_call.1} parent=5 // pred_fallthru
        _
      %p232 = scmp.lt.s32.totalorder %s18, 32
      // Predicated region
      $region25: #{tpu_custom_call.1} parent=5 // pred_check
        %p233 = pneg %p232
      $region26: #{tpu_custom_call.1} parent=5 // pred_check_branch
        %235 = sbr.rel (%p233) target = $region28
      $region27: #{tpu_custom_call.1} parent=5 // pred_region
        // Predicated region
        $region29: #{tpu_custom_call.1} parent=27 // pred_check
          %p236 = pneg %p59
        $region30: #{tpu_custom_call.1} parent=27 // pred_check_branch
          %238 = sbr.rel (%p236) target = $region32
        $region31: #{tpu_custom_call.1} parent=27 // pred_region
          %s239 = sand.u32 %s49, 1
          %s240 = scalar_lea.sflag [#allocation4], %s239
          %s241 = sand.u32 %s49, 1
          %s242 = smul.addr %s241, 256
          %s243 = scalar_lea.vmem [#allocation3], %s242
          %s244 = smul.u32 32, %s25
          %s245 = smul.u32 2, %s27
          %247 = vsyncadd %s240, 0
          %s248 = smul.addr %s244, 2
          %s249 = sadd.s32 %s245, %s248
          %s250 = smul.addr %s249, 4
          %s251 = scalar_lea.hbm %s0, %s250
          %s252 = sshll.u32 %s251, 4
          %s253 = int_to_ptr.hbm [resolvable:$true] %s252
          %s254 = sshll.u32 %s243, 4
          %s255 = int_to_ptr.vmem [resolvable:$true] %s254
          %260 = dma.hbm_to_vmem [thread:$0]  %s253, 4096, %s255, %s240, 128, 128, 8
        $region32: #{tpu_custom_call.1} parent=27 // pred_fallthru
          _
      $region28: #{tpu_custom_call.1} parent=5 // pred_fallthru
        _
      %p261 = scmp.le.s32.totalorder 1, %s18
      %p262 = scmp.lt.s32.totalorder %s18, 33
      %p263 = pnand %p261, %p262
      %p264 = pneg %p263
      // Predicated region
      $region33: #{tpu_custom_call.1} parent=5 // pred_check
        _
      $region34: #{tpu_custom_call.1} parent=5 // pred_check_branch
        %266 = sbr.rel (%p263) target = $region36
      $region35: #{tpu_custom_call.1} parent=5 // pred_region
        %s267 = ssub.s32 %s18, 1
        %s268 = sand.u32 %s52, 1
        %s269 = scalar_lea.sflag [#allocation4], %s268
        %s270 = sand.u32 %s52, 1
        %s271 = smul.addr %s270, 256
        %s272 = scalar_lea.vmem [#allocation3], %s271
        // Predicated region
        $region37: #{tpu_custom_call.1} parent=35 // pred_check
          %p273 = pneg %p65
        $region38: #{tpu_custom_call.1} parent=35 // pred_check_branch
          %275 = sbr.rel (%p273) target = $region40
        $region39: #{tpu_custom_call.1} parent=35 // pred_region
          %277 = dma.done %s269, 4096
        $region40: #{tpu_custom_call.1} parent=35 // pred_fallthru
          _
        // Predicated region
        $region41: #{tpu_custom_call.1} parent=35 // pred_check
          %p278 = pneg %p93
        $region42: #{tpu_custom_call.1} parent=35 // pred_check_branch
          %280 = sbr.rel (%p278) target = $region44
        $region43: #{tpu_custom_call.1} parent=35 // pred_region
          %282 = dma.done [#allocation7], 2048
        $region44: #{tpu_custom_call.1} parent=35 // pred_fallthru
          _
        // Predicated region
        $region45: #{tpu_custom_call.1} parent=35 // pred_check
          %p283 = pneg %p119
        $region46: #{tpu_custom_call.1} parent=35 // pred_check_branch
          %285 = sbr.rel (%p283) target = $region48
        $region47: #{tpu_custom_call.1} parent=35 // pred_region
          %287 = dma.done [#allocation7], 16
        $region48: #{tpu_custom_call.1} parent=35 // pred_fallthru
          _
        // Predicated region
        $region49: #{tpu_custom_call.1} parent=35 // pred_check
          %p288 = pneg %p145
        $region50: #{tpu_custom_call.1} parent=35 // pred_check_branch
          %290 = sbr.rel (%p288) target = $region52
        $region51: #{tpu_custom_call.1} parent=35 // pred_region
          %292 = dma.done [#allocation10], 16
        $region52: #{tpu_custom_call.1} parent=35 // pred_fallthru
          _
        %s293 = sand.u32 %s52, 1
        %s294 = scalar_lea.sflag [#allocation4], %s293
        %s295 = sand.u32 %s52, 1
        %s296 = smul.addr %s295, 256
        %s297 = scalar_lea.vmem [#allocation3], %s296
        %p298 = pneg %p65
        %p299 = pneg %p62
        %p300 = pneg %p93
        %p301 = pneg %p90
        %p302 = pneg %p119
        %p303 = pneg %p116
        %p304 = pneg %p145
        %p305 = pneg %p142
        %p306 = pneg %p173
        %p307 = pneg %p170
        %s308 = sand.u32 %s160, 1
        %s309 = scalar_lea.sflag [#allocation5], %s308
        %s310 = sand.u32 %s160, 1
        %s311 = smul.addr %s310, 128
        %s312 = scalar_lea.vmem [#allocation11], %s311
        %s313 = smul.u32 32, %s28
        %s314 = smul.u32 2, %s30
        %s315 = smul.u32 32, %s30
        %s316 = smul.u32 32, %s28
        %p317 = scmp.eq.s32.totalorder %s30, 0
        // Predicated region
        $region53: #{tpu_custom_call.1} parent=35 // pred_check
          %p318 = pneg %p317
        $region54: #{tpu_custom_call.1} parent=35 // pred_check_branch
          %320 = sbr.rel (%p318) target = $region56
        $region55: #{tpu_custom_call.1} parent=35 // pred_region
          %321 = vst [vmem:[#allocation2] sm:$0xff] 0.0
          %322 = vst [vmem:[#allocation2 + $0x8] sm:$0xff] 0.0
          %323 = vst [vmem:[#allocation2 + $0x10] sm:$0xff] 0.0
          %324 = vst [vmem:[#allocation2 + $0x18] sm:$0xff] 0.0
          %325 = vst [vmem:[#allocation2 + $0x20] sm:$0xff] 0.0
          %326 = vst [vmem:[#allocation2 + $0x28] sm:$0xff] 0.0
          %327 = vst [vmem:[#allocation2 + $0x30] sm:$0xff] 0.0
          %328 = vst [vmem:[#allocation2 + $0x38] sm:$0xff] 0.0
          %329 = vst [vmem:[#allocation2 + $0x40] sm:$0xff] 0.0
          %330 = vst [vmem:[#allocation2 + $0x48] sm:$0xff] 0.0
          %331 = vst [vmem:[#allocation2 + $0x50] sm:$0xff] 0.0
          %332 = vst [vmem:[#allocation2 + $0x58] sm:$0xff] 0.0
          %333 = vst [vmem:[#allocation2 + $0x60] sm:$0xff] 0.0
          %334 = vst [vmem:[#allocation2 + $0x68] sm:$0xff] 0.0
          %335 = vst [vmem:[#allocation2 + $0x70] sm:$0xff] 0.0
          %336 = vst [vmem:[#allocation2 + $0x78] sm:$0xff] 0.0
          %337 = vst [vmem:[#allocation2 + $0x80] sm:$0xff] 0.0
          %338 = vst [vmem:[#allocation2 + $0x88] sm:$0xff] 0.0
          %339 = vst [vmem:[#allocation2 + $0x90] sm:$0xff] 0.0
          %340 = vst [vmem:[#allocation2 + $0x98] sm:$0xff] 0.0
          %341 = vst [vmem:[#allocation2 + $0xa0] sm:$0xff] 0.0
          %342 = vst [vmem:[#allocation2 + $0xa8] sm:$0xff] 0.0
          %343 = vst [vmem:[#allocation2 + $0xb0] sm:$0xff] 0.0
          %344 = vst [vmem:[#allocation2 + $0xb8] sm:$0xff] 0.0
          %345 = vst [vmem:[#allocation2 + $0xc0] sm:$0xff] 0.0
          %346 = vst [vmem:[#allocation2 + $0xc8] sm:$0xff] 0.0
          %347 = vst [vmem:[#allocation2 + $0xd0] sm:$0xff] 0.0
          %348 = vst [vmem:[#allocation2 + $0xd8] sm:$0xff] 0.0
          %349 = vst [vmem:[#allocation2 + $0xe0] sm:$0xff] 0.0
          %350 = vst [vmem:[#allocation2 + $0xe8] sm:$0xff] 0.0
          %351 = vst [vmem:[#allocation2 + $0xf0] sm:$0xff] 0.0
          %352 = vst [vmem:[#allocation2 + $0xf8] sm:$0xff] 0.0
        $region56: #{tpu_custom_call.1} parent=35 // pred_fallthru
          _
        %v353 = vld [vmem:[#allocation2] sm:$0xff]
        %v354 = vld [vmem:[#allocation2 + $0x8] sm:$0xff]
        %v355 = vld [vmem:[#allocation2 + $0x10] sm:$0xff]
        %v356 = vld [vmem:[#allocation2 + $0x18] sm:$0xff]
        %v357 = vld [vmem:[#allocation2 + $0x20] sm:$0xff]
        %v358 = vld [vmem:[#allocation2 + $0x28] sm:$0xff]
        %v359 = vld [vmem:[#allocation2 + $0x30] sm:$0xff]
        %v360 = vld [vmem:[#allocation2 + $0x38] sm:$0xff]
        %v361 = vld [vmem:[#allocation2 + $0x40] sm:$0xff]
        %v362 = vld [vmem:[#allocation2 + $0x48] sm:$0xff]
        %v363 = vld [vmem:[#allocation2 + $0x50] sm:$0xff]
        %v364 = vld [vmem:[#allocation2 + $0x58] sm:$0xff]
        %v365 = vld [vmem:[#allocation2 + $0x60] sm:$0xff]
        %v366 = vld [vmem:[#allocation2 + $0x68] sm:$0xff]
        %v367 = vld [vmem:[#allocation2 + $0x70] sm:$0xff]
        %v368 = vld [vmem:[#allocation2 + $0x78] sm:$0xff]
        %v369 = vld [vmem:[#allocation2 + $0x80] sm:$0xff]
        %v370 = vld [vmem:[#allocation2 + $0x88] sm:$0xff]
        %v371 = vld [vmem:[#allocation2 + $0x90] sm:$0xff]
        %v372 = vld [vmem:[#allocation2 + $0x98] sm:$0xff]
        %v373 = vld [vmem:[#allocation2 + $0xa0] sm:$0xff]
        %v374 = vld [vmem:[#allocation2 + $0xa8] sm:$0xff]
        %v375 = vld [vmem:[#allocation2 + $0xb0] sm:$0xff]
        %v376 = vld [vmem:[#allocation2 + $0xb8] sm:$0xff]
        %v377 = vld [vmem:[#allocation2 + $0xc0] sm:$0xff]
        %v378 = vld [vmem:[#allocation2 + $0xc8] sm:$0xff]
        %v379 = vld [vmem:[#allocation2 + $0xd0] sm:$0xff]
        %v380 = vld [vmem:[#allocation2 + $0xd8] sm:$0xff]
        %v381 = vld [vmem:[#allocation2 + $0xe0] sm:$0xff]
        %v382 = vld [vmem:[#allocation2 + $0xe8] sm:$0xff]
        %v383 = vld [vmem:[#allocation2 + $0xf0] sm:$0xff]
        %v384 = vld [vmem:[#allocation2 + $0xf8] sm:$0xff]
        %v385 = vld [vmem:[%s272] sm:$0xff]
        %v386 = vld [vmem:[%s272 + $0x8] sm:$0xff]
        %v387 = vld [vmem:[%s272 + $0x10] sm:$0xff]
        %v388 = vld [vmem:[%s272 + $0x18] sm:$0xff]
        %v389 = vld [vmem:[%s272 + $0x20] sm:$0xff]
        %v390 = vld [vmem:[%s272 + $0x28] sm:$0xff]
        %v391 = vld [vmem:[%s272 + $0x30] sm:$0xff]
        %v392 = vld [vmem:[%s272 + $0x38] sm:$0xff]
        %v393 = vld [vmem:[%s272 + $0x40] sm:$0xff]
        %v394 = vld [vmem:[%s272 + $0x48] sm:$0xff]
        %v395 = vld [vmem:[%s272 + $0x50] sm:$0xff]
        %v396 = vld [vmem:[%s272 + $0x58] sm:$0xff]
        %v397 = vld [vmem:[%s272 + $0x60] sm:$0xff]
        %v398 = vld [vmem:[%s272 + $0x68] sm:$0xff]
        %v399 = vld [vmem:[%s272 + $0x70] sm:$0xff]
        %v400 = vld [vmem:[%s272 + $0x78] sm:$0xff]
        %v401 = vld [vmem:[%s272 + $0x80] sm:$0xff]
        %v402 = vld [vmem:[%s272 + $0x88] sm:$0xff]
        %v403 = vld [vmem:[%s272 + $0x90] sm:$0xff]
        %v404 = vld [vmem:[%s272 + $0x98] sm:$0xff]
        %v405 = vld [vmem:[%s272 + $0xa0] sm:$0xff]
        %v406 = vld [vmem:[%s272 + $0xa8] sm:$0xff]
        %v407 = vld [vmem:[%s272 + $0xb0] sm:$0xff]
        %v408 = vld [vmem:[%s272 + $0xb8] sm:$0xff]
        %v409 = vld [vmem:[%s272 + $0xc0] sm:$0xff]
        %v410 = vld [vmem:[%s272 + $0xc8] sm:$0xff]
        %v411 = vld [vmem:[%s272 + $0xd0] sm:$0xff]
        %v412 = vld [vmem:[%s272 + $0xd8] sm:$0xff]
        %v413 = vld [vmem:[%s272 + $0xe0] sm:$0xff]
        %v414 = vld [vmem:[%s272 + $0xe8] sm:$0xff]
        %v415 = vld [vmem:[%s272 + $0xf0] sm:$0xff]
        %v416 = vld [vmem:[%s272 + $0xf8] sm:$0xff]
        %v417 = vld [vmem:[#allocation6] sm:$0xf]
        %v418 = vld [vmem:[#allocation6 + $0x4] sm:$0xf]
        %v419 = vld [vmem:[#allocation6 + $0x8] sm:$0xf]
        %v420 = vld [vmem:[#allocation6 + $0xc] sm:$0xf]
        %v421 = vld [vmem:[#allocation6 + $0x10] sm:$0xf]
        %v422 = vld [vmem:[#allocation6 + $0x14] sm:$0xf]
        %v423 = vld [vmem:[#allocation6 + $0x18] sm:$0xf]
        %v424 = vld [vmem:[#allocation6 + $0x1c] sm:$0xf]
        %v425 = vld [vmem:[#allocation6 + $0x20] sm:$0xf]
        %v426 = vld [vmem:[#allocation6 + $0x24] sm:$0xf]
        %v427 = vld [vmem:[#allocation6 + $0x28] sm:$0xf]
        %v428 = vld [vmem:[#allocation6 + $0x2c] sm:$0xf]
        %v429 = vld [vmem:[#allocation6 + $0x30] sm:$0xf]
        %v430 = vld [vmem:[#allocation6 + $0x34] sm:$0xf]
        %v431 = vld [vmem:[#allocation6 + $0x38] sm:$0xf]
        %v432 = vld [vmem:[#allocation6 + $0x3c] sm:$0xf]
        %v433 = vld [vmem:[#allocation6 + $0x40] sm:$0xf]
        %v434 = vld [vmem:[#allocation6 + $0x44] sm:$0xf]
        %v435 = vld [vmem:[#allocation6 + $0x48] sm:$0xf]
        %v436 = vld [vmem:[#allocation6 + $0x4c] sm:$0xf]
        %v437 = vld [vmem:[#allocation6 + $0x50] sm:$0xf]
        %v438 = vld [vmem:[#allocation6 + $0x54] sm:$0xf]
        %v439 = vld [vmem:[#allocation6 + $0x58] sm:$0xf]
        %v440 = vld [vmem:[#allocation6 + $0x5c] sm:$0xf]
        %v441 = vld [vmem:[#allocation6 + $0x60] sm:$0xf]
        %v442 = vld [vmem:[#allocation6 + $0x64] sm:$0xf]
        %v443 = vld [vmem:[#allocation6 + $0x68] sm:$0xf]
        %v444 = vld [vmem:[#allocation6 + $0x6c] sm:$0xf]
        %v445 = vld [vmem:[#allocation6 + $0x70] sm:$0xf]
        %v446 = vld [vmem:[#allocation6 + $0x74] sm:$0xf]
        %v447 = vld [vmem:[#allocation6 + $0x78] sm:$0xf]
        %v448 = vld [vmem:[#allocation6 + $0x7c] sm:$0xf]
        %v481 = vunpack.c.l.b16 %v385
        %v482 = vunpack.c.h.b16 %v385
        %v483 = vunpack.c.l.b16 %v386
        %v484 = vunpack.c.h.b16 %v386
        %v485 = vunpack.c.l.b16 %v387
        %v486 = vunpack.c.h.b16 %v387
        %v487 = vunpack.c.l.b16 %v388
        %v488 = vunpack.c.h.b16 %v388
        %v489 = vunpack.c.l.b16 %v389
        %v490 = vunpack.c.h.b16 %v389
        %v491 = vunpack.c.l.b16 %v390
        %v492 = vunpack.c.h.b16 %v390
        %v493 = vunpack.c.l.b16 %v391
        %v494 = vunpack.c.h.b16 %v391
        %v495 = vunpack.c.l.b16 %v392
        %v496 = vunpack.c.h.b16 %v392
        %v497 = vunpack.c.l.b16 %v393
        %v498 = vunpack.c.h.b16 %v393
        %v499 = vunpack.c.l.b16 %v394
        %v500 = vunpack.c.h.b16 %v394
        %v501 = vunpack.c.l.b16 %v395
        %v502 = vunpack.c.h.b16 %v395
        %v503 = vunpack.c.l.b16 %v396
        %v504 = vunpack.c.h.b16 %v396
        %v505 = vunpack.c.l.b16 %v397
        %v506 = vunpack.c.h.b16 %v397
        %v507 = vunpack.c.l.b16 %v398
        %v508 = vunpack.c.h.b16 %v398
        %v509 = vunpack.c.l.b16 %v399
        %v510 = vunpack.c.h.b16 %v399
        %v511 = vunpack.c.l.b16 %v400
        %v512 = vunpack.c.h.b16 %v400
        %v513 = vunpack.c.l.b16 %v401
        %v514 = vunpack.c.h.b16 %v401
        %v515 = vunpack.c.l.b16 %v402
        %v516 = vunpack.c.h.b16 %v402
        %v517 = vunpack.c.l.b16 %v403
        %v518 = vunpack.c.h.b16 %v403
        %v519 = vunpack.c.l.b16 %v404
        %v520 = vunpack.c.h.b16 %v404
        %v521 = vunpack.c.l.b16 %v405
        %v522 = vunpack.c.h.b16 %v405
        %v523 = vunpack.c.l.b16 %v406
        %v524 = vunpack.c.h.b16 %v406
        %v525 = vunpack.c.l.b16 %v407
        %v526 = vunpack.c.h.b16 %v407
        %v527 = vunpack.c.l.b16 %v408
        %v528 = vunpack.c.h.b16 %v408
        %v529 = vunpack.c.l.b16 %v409
        %v530 = vunpack.c.h.b16 %v409
        %v531 = vunpack.c.l.b16 %v410
        %v532 = vunpack.c.h.b16 %v410
        %v533 = vunpack.c.l.b16 %v411
        %v534 = vunpack.c.h.b16 %v411
        %v535 = vunpack.c.l.b16 %v412
        %v536 = vunpack.c.h.b16 %v412
        %v537 = vunpack.c.l.b16 %v413
        %v538 = vunpack.c.h.b16 %v413
        %v539 = vunpack.c.l.b16 %v414
        %v540 = vunpack.c.h.b16 %v414
        %v541 = vunpack.c.l.b16 %v415
        %v542 = vunpack.c.h.b16 %v415
        %v543 = vunpack.c.l.b16 %v416
        %v544 = vunpack.c.h.b16 %v416
        %v545 = vpack.c.b16 %v483, %v481
        %v546 = vpack.c.b16 %v484, %v482
        %v547 = vpack.c.b16 %v487, %v485
        %v548 = vpack.c.b16 %v488, %v486
        %v549 = vpack.c.b16 %v491, %v489
        %v550 = vpack.c.b16 %v492, %v490
        %v551 = vpack.c.b16 %v495, %v493
        %v552 = vpack.c.b16 %v496, %v494
        %v553 = vpack.c.b16 %v499, %v497
        %v554 = vpack.c.b16 %v500, %v498
        %v555 = vpack.c.b16 %v503, %v501
        %v556 = vpack.c.b16 %v504, %v502
        %v557 = vpack.c.b16 %v507, %v505
        %v558 = vpack.c.b16 %v508, %v506
        %v559 = vpack.c.b16 %v511, %v509
        %v560 = vpack.c.b16 %v512, %v510
        %v561 = vpack.c.b16 %v515, %v513
        %v562 = vpack.c.b16 %v516, %v514
        %v563 = vpack.c.b16 %v519, %v517
        %v564 = vpack.c.b16 %v520, %v518
        %v565 = vpack.c.b16 %v523, %v521
        %v566 = vpack.c.b16 %v524, %v522
        %v567 = vpack.c.b16 %v527, %v525
        %v568 = vpack.c.b16 %v528, %v526
        %v569 = vpack.c.b16 %v531, %v529
        %v570 = vpack.c.b16 %v532, %v530
        %v571 = vpack.c.b16 %v535, %v533
        %v572 = vpack.c.b16 %v536, %v534
        %v573 = vpack.c.b16 %v539, %v537
        %v574 = vpack.c.b16 %v540, %v538
        %v575 = vpack.c.b16 %v543, %v541
        %v576 = vpack.c.b16 %v544, %v542
        %v641 = vunpack.c.l.b16 %v417
        %v642 = vunpack.c.l.b16 %v418
        %v643 = vunpack.c.l.b16 %v419
        %v644 = vunpack.c.l.b16 %v420
        %v645 = vunpack.c.l.b16 %v421
        %v646 = vunpack.c.l.b16 %v422
        %v647 = vunpack.c.l.b16 %v423
        %v648 = vunpack.c.l.b16 %v424
        %v649 = vunpack.c.l.b16 %v425
        %v650 = vunpack.c.l.b16 %v426
        %v651 = vunpack.c.l.b16 %v427
        %v652 = vunpack.c.l.b16 %v428
        %v653 = vunpack.c.l.b16 %v429
        %v654 = vunpack.c.l.b16 %v430
        %v655 = vunpack.c.l.b16 %v431
        %v656 = vunpack.c.l.b16 %v432
        %v657 = vunpack.c.l.b16 %v433
        %v658 = vunpack.c.l.b16 %v434
        %v659 = vunpack.c.l.b16 %v435
        %v660 = vunpack.c.l.b16 %v436
        %v661 = vunpack.c.l.b16 %v437
        %v662 = vunpack.c.l.b16 %v438
        %v663 = vunpack.c.l.b16 %v439
        %v664 = vunpack.c.l.b16 %v440
        %v665 = vunpack.c.l.b16 %v441
        %v666 = vunpack.c.l.b16 %v442
        %v667 = vunpack.c.l.b16 %v443
        %v668 = vunpack.c.l.b16 %v444
        %v669 = vunpack.c.l.b16 %v445
        %v670 = vunpack.c.l.b16 %v446
        %v671 = vunpack.c.l.b16 %v447
        %v672 = vunpack.c.l.b16 %v448
        %v673 = vpack.c.b16 %v642, %v641
        %v674 = vpack.c.b16 %v644, %v643
        %v675 = vpack.c.b16 %v646, %v645
        %v676 = vpack.c.b16 %v648, %v647
        %v677 = vpack.c.b16 %v650, %v649
        %v678 = vpack.c.b16 %v652, %v651
        %v679 = vpack.c.b16 %v654, %v653
        %v680 = vpack.c.b16 %v656, %v655
        %v681 = vpack.c.b16 %v658, %v657
        %v682 = vpack.c.b16 %v660, %v659
        %v683 = vpack.c.b16 %v662, %v661
        %v684 = vpack.c.b16 %v664, %v663
        %v685 = vpack.c.b16 %v666, %v665
        %v686 = vpack.c.b16 %v668, %v667
        %v687 = vpack.c.b16 %v670, %v669
        %v688 = vpack.c.b16 %v672, %v671
        %705 = vmatpush.bf16.msra.mxu0 %v680
        %706 = vmatpush.bf16.msra.mxu0 %v679
        %707 = vmatpush.bf16.msra.mxu0 %v678
        %708 = vmatpush.bf16.msra.mxu0 %v677
        %709 = vmatpush.bf16.msra.mxu0 %v676
        %710 = vmatpush.bf16.msra.mxu0 %v675
        %711 = vmatpush.bf16.msra.mxu0 %v674
        %712 = vmatpush.bf16.msra.mxu0 %v673
        %713 = vmatmul.bf16.gmra.mxu0 %v545
        %v714 = vpop.f32.mrf.mxu0
        %v715 = vadd.f32 0.0, %v714
        %v716 = vpop.f32.mrf.mxu0
        %v717 = vadd.f32 0.0, %v716
        %718 = vmatmul.bf16.gmra.mxu0 %v547
        %v719 = vpop.f32.mrf.mxu0
        %v720 = vadd.f32 0.0, %v719
        %v721 = vpop.f32.mrf.mxu0
        %v722 = vadd.f32 0.0, %v721
        %723 = vmatmul.bf16.gmra.mxu0 %v549
        %v724 = vpop.f32.mrf.mxu0
        %v725 = vadd.f32 0.0, %v724
        %v726 = vpop.f32.mrf.mxu0
        %v727 = vadd.f32 0.0, %v726
        %728 = vmatmul.bf16.gmra.mxu0 %v551
        %v729 = vpop.f32.mrf.mxu0
        %v730 = vadd.f32 0.0, %v729
        %v731 = vpop.f32.mrf.mxu0
        %v732 = vadd.f32 0.0, %v731
        %733 = vmatmul.bf16.gmra.mxu0 %v553
        %v734 = vpop.f32.mrf.mxu0
        %v735 = vadd.f32 0.0, %v734
        %v736 = vpop.f32.mrf.mxu0
        %v737 = vadd.f32 0.0, %v736
        %738 = vmatmul.bf16.gmra.mxu0 %v555
        %v739 = vpop.f32.mrf.mxu0
        %v740 = vadd.f32 0.0, %v739
        %v741 = vpop.f32.mrf.mxu0
        %v742 = vadd.f32 0.0, %v741
        %743 = vmatmul.bf16.gmra.mxu0 %v557
        %v744 = vpop.f32.mrf.mxu0
        %v745 = vadd.f32 0.0, %v744
        %v746 = vpop.f32.mrf.mxu0
        %v747 = vadd.f32 0.0, %v746
        %748 = vmatmul.bf16.gmra.mxu0 %v559
        %v749 = vpop.f32.mrf.mxu0
        %v750 = vadd.f32 0.0, %v749
        %v751 = vpop.f32.mrf.mxu0
        %v752 = vadd.f32 0.0, %v751
        %753 = vmatmul.bf16.gmra.mxu0 %v561
        %v754 = vpop.f32.mrf.mxu0
        %v755 = vadd.f32 0.0, %v754
        %v756 = vpop.f32.mrf.mxu0
        %v757 = vadd.f32 0.0, %v756
        %758 = vmatmul.bf16.gmra.mxu0 %v563
        %v759 = vpop.f32.mrf.mxu0
        %v760 = vadd.f32 0.0, %v759
        %v761 = vpop.f32.mrf.mxu0
        %v762 = vadd.f32 0.0, %v761
        %763 = vmatmul.bf16.gmra.mxu0 %v565
        %v764 = vpop.f32.mrf.mxu0
        %v765 = vadd.f32 0.0, %v764
        %v766 = vpop.f32.mrf.mxu0
        %v767 = vadd.f32 0.0, %v766
        %768 = vmatmul.bf16.gmra.mxu0 %v567
        %v769 = vpop.f32.mrf.mxu0
        %v770 = vadd.f32 0.0, %v769
        %v771 = vpop.f32.mrf.mxu0
        %v772 = vadd.f32 0.0, %v771
        %773 = vmatmul.bf16.gmra.mxu0 %v569
        %v774 = vpop.f32.mrf.mxu0
        %v775 = vadd.f32 0.0, %v774
        %v776 = vpop.f32.mrf.mxu0
        %v777 = vadd.f32 0.0, %v776
        %778 = vmatmul.bf16.gmra.mxu0 %v571
        %v779 = vpop.f32.mrf.mxu0
        %v780 = vadd.f32 0.0, %v779
        %v781 = vpop.f32.mrf.mxu0
        %v782 = vadd.f32 0.0, %v781
        %783 = vmatmul.bf16.gmra.mxu0 %v573
        %v784 = vpop.f32.mrf.mxu0
        %v785 = vadd.f32 0.0, %v784
        %v786 = vpop.f32.mrf.mxu0
        %v787 = vadd.f32 0.0, %v786
        %788 = vmatmul.bf16.gmra.mxu0 %v575
        %v789 = vpop.f32.mrf.mxu0
        %v790 = vadd.f32 0.0, %v789
        %v791 = vpop.f32.mrf.mxu0
        %v792 = vadd.f32 0.0, %v791
        %793 = vdwg.mxu0
        %794 = vmatpush.bf16.msra.mxu0 %v688
        %795 = vmatpush.bf16.msra.mxu0 %v687
        %796 = vmatpush.bf16.msra.mxu0 %v686
        %797 = vmatpush.bf16.msra.mxu0 %v685
        %798 = vmatpush.bf16.msra.mxu0 %v684
        %799 = vmatpush.bf16.msra.mxu0 %v683
        %800 = vmatpush.bf16.msra.mxu0 %v682
        %801 = vmatpush.bf16.msra.mxu0 %v681
        %802 = vmatmul.bf16.gmra.mxu0 %v546
        %v803 = vpop.f32.mrf.mxu0
        %v804 = vadd.f32 %v715, %v803
        %v805 = vpop.f32.mrf.mxu0
        %v806 = vadd.f32 %v717, %v805
        %807 = vmatmul.bf16.gmra.mxu0 %v548
        %v808 = vpop.f32.mrf.mxu0
        %v809 = vadd.f32 %v720, %v808
        %v810 = vpop.f32.mrf.mxu0
        %v811 = vadd.f32 %v722, %v810
        %812 = vmatmul.bf16.gmra.mxu0 %v550
        %v813 = vpop.f32.mrf.mxu0
        %v814 = vadd.f32 %v725, %v813
        %v815 = vpop.f32.mrf.mxu0
        %v816 = vadd.f32 %v727, %v815
        %817 = vmatmul.bf16.gmra.mxu0 %v552
        %v818 = vpop.f32.mrf.mxu0
        %v819 = vadd.f32 %v730, %v818
        %v820 = vpop.f32.mrf.mxu0
        %v821 = vadd.f32 %v732, %v820
        %822 = vmatmul.bf16.gmra.mxu0 %v554
        %v823 = vpop.f32.mrf.mxu0
        %v824 = vadd.f32 %v735, %v823
        %v825 = vpop.f32.mrf.mxu0
        %v826 = vadd.f32 %v737, %v825
        %827 = vmatmul.bf16.gmra.mxu0 %v556
        %v828 = vpop.f32.mrf.mxu0
        %v829 = vadd.f32 %v740, %v828
        %v830 = vpop.f32.mrf.mxu0
        %v831 = vadd.f32 %v742, %v830
        %832 = vmatmul.bf16.gmra.mxu0 %v558
        %v833 = vpop.f32.mrf.mxu0
        %v834 = vadd.f32 %v745, %v833
        %v835 = vpop.f32.mrf.mxu0
        %v836 = vadd.f32 %v747, %v835
        %837 = vmatmul.bf16.gmra.mxu0 %v560
        %v838 = vpop.f32.mrf.mxu0
        %v839 = vadd.f32 %v750, %v838
        %v840 = vpop.f32.mrf.mxu0
        %v841 = vadd.f32 %v752, %v840
        %842 = vmatmul.bf16.gmra.mxu0 %v562
        %v843 = vpop.f32.mrf.mxu0
        %v844 = vadd.f32 %v755, %v843
        %v845 = vpop.f32.mrf.mxu0
        %v846 = vadd.f32 %v757, %v845
        %847 = vmatmul.bf16.gmra.mxu0 %v564
        %v848 = vpop.f32.mrf.mxu0
        %v849 = vadd.f32 %v760, %v848
        %v850 = vpop.f32.mrf.mxu0
        %v851 = vadd.f32 %v762, %v850
        %852 = vmatmul.bf16.gmra.mxu0 %v566
        %v853 = vpop.f32.mrf.mxu0
        %v854 = vadd.f32 %v765, %v853
        %v855 = vpop.f32.mrf.mxu0
        %v856 = vadd.f32 %v767, %v855
        %857 = vmatmul.bf16.gmra.mxu0 %v568
        %v858 = vpop.f32.mrf.mxu0
        %v859 = vadd.f32 %v770, %v858
        %v860 = vpop.f32.mrf.mxu0
        %v861 = vadd.f32 %v772, %v860
        %862 = vmatmul.bf16.gmra.mxu0 %v570
        %v863 = vpop.f32.mrf.mxu0
        %v864 = vadd.f32 %v775, %v863
        %v865 = vpop.f32.mrf.mxu0
        %v866 = vadd.f32 %v777, %v865
        %867 = vmatmul.bf16.gmra.mxu0 %v572
        %v868 = vpop.f32.mrf.mxu0
        %v869 = vadd.f32 %v780, %v868
        %v870 = vpop.f32.mrf.mxu0
        %v871 = vadd.f32 %v782, %v870
        %872 = vmatmul.bf16.gmra.mxu0 %v574
        %v873 = vpop.f32.mrf.mxu0
        %v874 = vadd.f32 %v785, %v873
        %v875 = vpop.f32.mrf.mxu0
        %v876 = vadd.f32 %v787, %v875
        %877 = vmatmul.bf16.gmra.mxu0 %v576
        %v878 = vpop.f32.mrf.mxu0
        %v879 = vadd.f32 %v790, %v878
        %v880 = vpop.f32.mrf.mxu0
        %v881 = vadd.f32 %v792, %v880
        %882 = vdwg.mxu0
        %v883 = vadd.f32 %v353, %v804
        %v884 = vadd.f32 %v354, %v806
        %v885 = vadd.f32 %v355, %v809
        %v886 = vadd.f32 %v356, %v811
        %v887 = vadd.f32 %v357, %v814
        %v888 = vadd.f32 %v358, %v816
        %v889 = vadd.f32 %v359, %v819
        %v890 = vadd.f32 %v360, %v821
        %v891 = vadd.f32 %v361, %v824
        %v892 = vadd.f32 %v362, %v826
        %v893 = vadd.f32 %v363, %v829
        %v894 = vadd.f32 %v364, %v831
        %v895 = vadd.f32 %v365, %v834
        %v896 = vadd.f32 %v366, %v836
        %v897 = vadd.f32 %v367, %v839
        %v898 = vadd.f32 %v368, %v841
        %v899 = vadd.f32 %v369, %v844
        %v900 = vadd.f32 %v370, %v846
        %v901 = vadd.f32 %v371, %v849
        %v902 = vadd.f32 %v372, %v851
        %v903 = vadd.f32 %v373, %v854
        %v904 = vadd.f32 %v374, %v856
        %v905 = vadd.f32 %v375, %v859
        %v906 = vadd.f32 %v376, %v861
        %v907 = vadd.f32 %v377, %v864
        %v908 = vadd.f32 %v378, %v866
        %v909 = vadd.f32 %v379, %v869
        %v910 = vadd.f32 %v380, %v871
        %v911 = vadd.f32 %v381, %v874
        %v912 = vadd.f32 %v382, %v876
        %v913 = vadd.f32 %v383, %v879
        %v914 = vadd.f32 %v384, %v881
        %915 = vst [vmem:[#allocation2] sm:$0xff] %v883
        %916 = vst [vmem:[#allocation2 + $0x8] sm:$0xff] %v884
        %917 = vst [vmem:[#allocation2 + $0x10] sm:$0xff] %v885
        %918 = vst [vmem:[#allocation2 + $0x18] sm:$0xff] %v886
        %919 = vst [vmem:[#allocation2 + $0x20] sm:$0xff] %v887
        %920 = vst [vmem:[#allocation2 + $0x28] sm:$0xff] %v888
        %921 = vst [vmem:[#allocation2 + $0x30] sm:$0xff] %v889
        %922 = vst [vmem:[#allocation2 + $0x38] sm:$0xff] %v890
        %923 = vst [vmem:[#allocation2 + $0x40] sm:$0xff] %v891
        %924 = vst [vmem:[#allocation2 + $0x48] sm:$0xff] %v892
        %925 = vst [vmem:[#allocation2 + $0x50] sm:$0xff] %v893
        %926 = vst [vmem:[#allocation2 + $0x58] sm:$0xff] %v894
        %927 = vst [vmem:[#allocation2 + $0x60] sm:$0xff] %v895
        %928 = vst [vmem:[#allocation2 + $0x68] sm:$0xff] %v896
        %929 = vst [vmem:[#allocation2 + $0x70] sm:$0xff] %v897
        %930 = vst [vmem:[#allocation2 + $0x78] sm:$0xff] %v898
        %931 = vst [vmem:[#allocation2 + $0x80] sm:$0xff] %v899
        %932 = vst [vmem:[#allocation2 + $0x88] sm:$0xff] %v900
        %933 = vst [vmem:[#allocation2 + $0x90] sm:$0xff] %v901
        %934 = vst [vmem:[#allocation2 + $0x98] sm:$0xff] %v902
        %935 = vst [vmem:[#allocation2 + $0xa0] sm:$0xff] %v903
        %936 = vst [vmem:[#allocation2 + $0xa8] sm:$0xff] %v904
        %937 = vst [vmem:[#allocation2 + $0xb0] sm:$0xff] %v905
        %938 = vst [vmem:[#allocation2 + $0xb8] sm:$0xff] %v906
        %939 = vst [vmem:[#allocation2 + $0xc0] sm:$0xff] %v907
        %940 = vst [vmem:[#allocation2 + $0xc8] sm:$0xff] %v908
        %941 = vst [vmem:[#allocation2 + $0xd0] sm:$0xff] %v909
        %942 = vst [vmem:[#allocation2 + $0xd8] sm:$0xff] %v910
        %943 = vst [vmem:[#allocation2 + $0xe0] sm:$0xff] %v911
        %944 = vst [vmem:[#allocation2 + $0xe8] sm:$0xff] %v912
        %945 = vst [vmem:[#allocation2 + $0xf0] sm:$0xff] %v913
        %946 = vst [vmem:[#allocation2 + $0xf8] sm:$0xff] %v914
        // Predicated region
        $region57: #{tpu_custom_call.1} parent=35 // pred_check
          %p947 = pneg %p317
        $region58: #{tpu_custom_call.1} parent=35 // pred_check_branch
          %949 = sbr.rel (%p947) target = $region60
        $region59: #{tpu_custom_call.1} parent=35 // pred_region
          %v950 = vld [vmem:[#allocation2] sm:$0xff]
          %v951 = vld [vmem:[#allocation2 + $0x8] sm:$0xff]
          %v952 = vld [vmem:[#allocation2 + $0x10] sm:$0xff]
          %v953 = vld [vmem:[#allocation2 + $0x18] sm:$0xff]
          %v954 = vld [vmem:[#allocation2 + $0x20] sm:$0xff]
          %v955 = vld [vmem:[#allocation2 + $0x28] sm:$0xff]
          %v956 = vld [vmem:[#allocation2 + $0x30] sm:$0xff]
          %v957 = vld [vmem:[#allocation2 + $0x38] sm:$0xff]
          %v958 = vld [vmem:[#allocation2 + $0x40] sm:$0xff]
          %v959 = vld [vmem:[#allocation2 + $0x48] sm:$0xff]
          %v960 = vld [vmem:[#allocation2 + $0x50] sm:$0xff]
          %v961 = vld [vmem:[#allocation2 + $0x58] sm:$0xff]
          %v962 = vld [vmem:[#allocation2 + $0x60] sm:$0xff]
          %v963 = vld [vmem:[#allocation2 + $0x68] sm:$0xff]
          %v964 = vld [vmem:[#allocation2 + $0x70] sm:$0xff]
          %v965 = vld [vmem:[#allocation2 + $0x78] sm:$0xff]
          %v966 = vld [vmem:[#allocation2 + $0x80] sm:$0xff]
          %v967 = vld [vmem:[#allocation2 + $0x88] sm:$0xff]
          %v968 = vld [vmem:[#allocation2 + $0x90] sm:$0xff]
          %v969 = vld [vmem:[#allocation2 + $0x98] sm:$0xff]
          %v970 = vld [vmem:[#allocation2 + $0xa0] sm:$0xff]
          %v971 = vld [vmem:[#allocation2 + $0xa8] sm:$0xff]
          %v972 = vld [vmem:[#allocation2 + $0xb0] sm:$0xff]
          %v973 = vld [vmem:[#allocation2 + $0xb8] sm:$0xff]
          %v974 = vld [vmem:[#allocation2 + $0xc0] sm:$0xff]
          %v975 = vld [vmem:[#allocation2 + $0xc8] sm:$0xff]
          %v976 = vld [vmem:[#allocation2 + $0xd0] sm:$0xff]
          %v977 = vld [vmem:[#allocation2 + $0xd8] sm:$0xff]
          %v978 = vld [vmem:[#allocation2 + $0xe0] sm:$0xff]
          %v979 = vld [vmem:[#allocation2 + $0xe8] sm:$0xff]
          %v980 = vld [vmem:[#allocation2 + $0xf0] sm:$0xff]
          %v981 = vld [vmem:[#allocation2 + $0xf8] sm:$0xff]
          %v982 = vld [vmem:[#allocation8] sm:$0x1]
          %v984 = vperm.slane %v982, 0
          %v986 = vmul.f32 %v950, %v984
          %v987 = vmul.f32 %v951, %v984
          %v988 = vmul.f32 %v952, %v984
          %v989 = vmul.f32 %v953, %v984
          %v990 = vmul.f32 %v954, %v984
          %v991 = vmul.f32 %v955, %v984
          %v992 = vmul.f32 %v956, %v984
          %v993 = vmul.f32 %v957, %v984
          %v994 = vmul.f32 %v958, %v984
          %v995 = vmul.f32 %v959, %v984
          %v996 = vmul.f32 %v960, %v984
          %v997 = vmul.f32 %v961, %v984
          %v998 = vmul.f32 %v962, %v984
          %v999 = vmul.f32 %v963, %v984
          %v1000 = vmul.f32 %v964, %v984
          %v1001 = vmul.f32 %v965, %v984
          %v1002 = vmul.f32 %v966, %v984
          %v1003 = vmul.f32 %v967, %v984
          %v1004 = vmul.f32 %v968, %v984
          %v1005 = vmul.f32 %v969, %v984
          %v1006 = vmul.f32 %v970, %v984
          %v1007 = vmul.f32 %v971, %v984
          %v1008 = vmul.f32 %v972, %v984
          %v1009 = vmul.f32 %v973, %v984
          %v1010 = vmul.f32 %v974, %v984
          %v1011 = vmul.f32 %v975, %v984
          %v1012 = vmul.f32 %v976, %v984
          %v1013 = vmul.f32 %v977, %v984
          %v1014 = vmul.f32 %v978, %v984
          %v1015 = vmul.f32 %v979, %v984
          %v1016 = vmul.f32 %v980, %v984
          %v1017 = vmul.f32 %v981, %v984
          %v1018 = vld [vmem:[#allocation9] sm:$0x1]
          %v1020 = vperm.slane %v1018, 0
          %v1022 = vadd.f32 %v986, %v1020
          %v1023 = vadd.f32 %v987, %v1020
          %v1024 = vadd.f32 %v988, %v1020
          %v1025 = vadd.f32 %v989, %v1020
          %v1026 = vadd.f32 %v990, %v1020
          %v1027 = vadd.f32 %v991, %v1020
          %v1028 = vadd.f32 %v992, %v1020
          %v1029 = vadd.f32 %v993, %v1020
          %v1030 = vadd.f32 %v994, %v1020
          %v1031 = vadd.f32 %v995, %v1020
          %v1032 = vadd.f32 %v996, %v1020
          %v1033 = vadd.f32 %v997, %v1020
          %v1034 = vadd.f32 %v998, %v1020
          %v1035 = vadd.f32 %v999, %v1020
          %v1036 = vadd.f32 %v1000, %v1020
          %v1037 = vadd.f32 %v1001, %v1020
          %v1038 = vadd.f32 %v1002, %v1020
          %v1039 = vadd.f32 %v1003, %v1020
          %v1040 = vadd.f32 %v1004, %v1020
          %v1041 = vadd.f32 %v1005, %v1020
          %v1042 = vadd.f32 %v1006, %v1020
          %v1043 = vadd.f32 %v1007, %v1020
          %v1044 = vadd.f32 %v1008, %v1020
          %v1045 = vadd.f32 %v1009, %v1020
          %v1046 = vadd.f32 %v1010, %v1020
          %v1047 = vadd.f32 %v1011, %v1020
          %v1048 = vadd.f32 %v1012, %v1020
          %v1049 = vadd.f32 %v1013, %v1020
          %v1050 = vadd.f32 %v1014, %v1020
          %v1051 = vadd.f32 %v1015, %v1020
          %v1052 = vadd.f32 %v1016, %v1020
          %v1053 = vadd.f32 %v1017, %v1020
          %v1054 = vmax.f32 %v1022, 0.0
          %v1055 = vmax.f32 %v1023, 0.0
          %v1056 = vmax.f32 %v1024, 0.0
          %v1057 = vmax.f32 %v1025, 0.0
          %v1058 = vmax.f32 %v1026, 0.0
          %v1059 = vmax.f32 %v1027, 0.0
          %v1060 = vmax.f32 %v1028, 0.0
          %v1061 = vmax.f32 %v1029, 0.0
          %v1062 = vmax.f32 %v1030, 0.0
          %v1063 = vmax.f32 %v1031, 0.0
          %v1064 = vmax.f32 %v1032, 0.0
          %v1065 = vmax.f32 %v1033, 0.0
          %v1066 = vmax.f32 %v1034, 0.0
          %v1067 = vmax.f32 %v1035, 0.0
          %v1068 = vmax.f32 %v1036, 0.0
          %v1069 = vmax.f32 %v1037, 0.0
          %v1070 = vmax.f32 %v1038, 0.0
          %v1071 = vmax.f32 %v1039, 0.0
          %v1072 = vmax.f32 %v1040, 0.0
          %v1073 = vmax.f32 %v1041, 0.0
          %v1074 = vmax.f32 %v1042, 0.0
          %v1075 = vmax.f32 %v1043, 0.0
          %v1076 = vmax.f32 %v1044, 0.0
          %v1077 = vmax.f32 %v1045, 0.0
          %v1078 = vmax.f32 %v1046, 0.0
          %v1079 = vmax.f32 %v1047, 0.0
          %v1080 = vmax.f32 %v1048, 0.0
          %v1081 = vmax.f32 %v1049, 0.0
          %v1082 = vmax.f32 %v1050, 0.0
          %v1083 = vmax.f32 %v1051, 0.0
          %v1084 = vmax.f32 %v1052, 0.0
          %v1085 = vmax.f32 %v1053, 0.0
          %v1086 = vpack.c.bf16 %v1054, %v1054
          %v1087 = vpack.c.bf16 %v1055, %v1055
          %v1088 = vpack.c.bf16 %v1056, %v1056
          %v1089 = vpack.c.bf16 %v1057, %v1057
          %v1090 = vpack.c.bf16 %v1058, %v1058
          %v1091 = vpack.c.bf16 %v1059, %v1059
          %v1092 = vpack.c.bf16 %v1060, %v1060
          %v1093 = vpack.c.bf16 %v1061, %v1061
          %v1094 = vpack.c.bf16 %v1062, %v1062
          %v1095 = vpack.c.bf16 %v1063, %v1063
          %v1096 = vpack.c.bf16 %v1064, %v1064
          %v1097 = vpack.c.bf16 %v1065, %v1065
          %v1098 = vpack.c.bf16 %v1066, %v1066
          %v1099 = vpack.c.bf16 %v1067, %v1067
          %v1100 = vpack.c.bf16 %v1068, %v1068
          %v1101 = vpack.c.bf16 %v1069, %v1069
          %v1102 = vpack.c.bf16 %v1070, %v1070
          %v1103 = vpack.c.bf16 %v1071, %v1071
          %v1104 = vpack.c.bf16 %v1072, %v1072
          %v1105 = vpack.c.bf16 %v1073, %v1073
          %v1106 = vpack.c.bf16 %v1074, %v1074
          %v1107 = vpack.c.bf16 %v1075, %v1075
          %v1108 = vpack.c.bf16 %v1076, %v1076
          %v1109 = vpack.c.bf16 %v1077, %v1077
          %v1110 = vpack.c.bf16 %v1078, %v1078
          %v1111 = vpack.c.bf16 %v1079, %v1079
          %v1112 = vpack.c.bf16 %v1080, %v1080
          %v1113 = vpack.c.bf16 %v1081, %v1081
          %v1114 = vpack.c.bf16 %v1082, %v1082
          %v1115 = vpack.c.bf16 %v1083, %v1083
          %v1116 = vpack.c.bf16 %v1084, %v1084
          %v1117 = vpack.c.bf16 %v1085, %v1085
          %1118 = vst [vmem:[%s312] sm:$0xf] %v1086
          %1119 = vst [vmem:[%s312 + $0x4] sm:$0xf] %v1087
          %1120 = vst [vmem:[%s312 + $0x8] sm:$0xf] %v1088
          %1121 = vst [vmem:[%s312 + $0xc] sm:$0xf] %v1089
          %1122 = vst [vmem:[%s312 + $0x10] sm:$0xf] %v1090
          %1123 = vst [vmem:[%s312 + $0x14] sm:$0xf] %v1091
          %1124 = vst [vmem:[%s312 + $0x18] sm:$0xf] %v1092
          %1125 = vst [vmem:[%s312 + $0x1c] sm:$0xf] %v1093
          %1126 = vst [vmem:[%s312 + $0x20] sm:$0xf] %v1094
          %1127 = vst [vmem:[%s312 + $0x24] sm:$0xf] %v1095
          %1128 = vst [vmem:[%s312 + $0x28] sm:$0xf] %v1096
          %1129 = vst [vmem:[%s312 + $0x2c] sm:$0xf] %v1097
          %1130 = vst [vmem:[%s312 + $0x30] sm:$0xf] %v1098
          %1131 = vst [vmem:[%s312 + $0x34] sm:$0xf] %v1099
          %1132 = vst [vmem:[%s312 + $0x38] sm:$0xf] %v1100
          %1133 = vst [vmem:[%s312 + $0x3c] sm:$0xf] %v1101
          %1134 = vst [vmem:[%s312 + $0x40] sm:$0xf] %v1102
          %1135 = vst [vmem:[%s312 + $0x44] sm:$0xf] %v1103
          %1136 = vst [vmem:[%s312 + $0x48] sm:$0xf] %v1104
          %1137 = vst [vmem:[%s312 + $0x4c] sm:$0xf] %v1105
          %1138 = vst [vmem:[%s312 + $0x50] sm:$0xf] %v1106
          %1139 = vst [vmem:[%s312 + $0x54] sm:$0xf] %v1107
          %1140 = vst [vmem:[%s312 + $0x58] sm:$0xf] %v1108
          %1141 = vst [vmem:[%s312 + $0x5c] sm:$0xf] %v1109
          %1142 = vst [vmem:[%s312 + $0x60] sm:$0xf] %v1110
          %1143 = vst [vmem:[%s312 + $0x64] sm:$0xf] %v1111
          %1144 = vst [vmem:[%s312 + $0x68] sm:$0xf] %v1112
          %1145 = vst [vmem:[%s312 + $0x6c] sm:$0xf] %v1113
          %1146 = vst [vmem:[%s312 + $0x70] sm:$0xf] %v1114
          %1147 = vst [vmem:[%s312 + $0x74] sm:$0xf] %v1115
          %1148 = vst [vmem:[%s312 + $0x78] sm:$0xf] %v1116
          %1149 = vst [vmem:[%s312 + $0x7c] sm:$0xf] %v1117
        $region60: #{tpu_custom_call.1} parent=35 // pred_fallthru
          _
        %s1150 = sand.u32 %s160, 1
        %s1151 = scalar_lea.sflag [#allocation5], %s1150
        %s1152 = sand.u32 %s160, 1
        %s1153 = smul.addr %s1152, 128
        %s1154 = scalar_lea.vmem [#allocation11], %s1153
        // Predicated region
        $region61: #{tpu_custom_call.1} parent=35 // pred_check
          %p1155 = pneg %p170
        $region62: #{tpu_custom_call.1} parent=35 // pred_check_branch
          %1157 = sbr.rel (%p1155) target = $region64
        $region63: #{tpu_custom_call.1} parent=35 // pred_region
          %s1158 = smul.u32 32, %s28
          %1160 = vsyncadd %s1151, 0
          %s1161 = sadd.s32 %s29, %s1158
          %s1162 = smul.addr %s1161, 4
          %s1163 = scalar_lea.hbm %s4, %s1162
          %s1164 = sshll.u32 %s1154, 4
          %s1165 = int_to_ptr.vmem [resolvable:$true] %s1164
          %s1166 = sshll.u32 %s1163, 4
          %s1167 = int_to_ptr.hbm [resolvable:$true] %s1166
          %1172 = dma.vmem_to_hbm [thread:$0]  %s1165, 2048, %s1167, %s1151, 64, 64, 4
        $region64: #{tpu_custom_call.1} parent=35 // pred_fallthru
          _
      $region36: #{tpu_custom_call.1} parent=5 // pred_fallthru
        _
      %p1173 = scmp.le.s32.totalorder 2, %s18
      // Predicated region
      $region65: #{tpu_custom_call.1} parent=5 // pred_check
        %p1174 = pneg %p1173
      $region66: #{tpu_custom_call.1} parent=5 // pred_check_branch
        %1176 = sbr.rel (%p1174) target = $region68
      $region67: #{tpu_custom_call.1} parent=5 // pred_region
        %s1177 = ssub.s32 %s18, 2
        // Predicated region
        $region69: #{tpu_custom_call.1} parent=67 // pred_check
          %p1178 = pneg %p176
        $region70: #{tpu_custom_call.1} parent=67 // pred_check_branch
          %1180 = sbr.rel (%p1178) target = $region72
        $region71: #{tpu_custom_call.1} parent=67 // pred_region
          %s1181 = sand.u32 %s161, 1
          %s1182 = scalar_lea.sflag [#allocation5], %s1181
          %s1183 = sand.u32 %s161, 1
          %s1184 = smul.addr %s1183, 128
          %s1185 = scalar_lea.vmem [#allocation11], %s1184
          %1187 = dma.done %s1182, 2048
        $region72: #{tpu_custom_call.1} parent=67 // pred_fallthru
          _
      $region68: #{tpu_custom_call.1} parent=5 // pred_fallthru
        _
    $region6: #{tpu_custom_call.1} parent=1 // loop_footer
      %s22 = sadd.s32 1, %s18
    $region7: #{tpu_custom_call.1} parent=1 // loop_footer_branch
      %17 = sbr.rel target = $region3
    $region8: #{tpu_custom_call.1} parent=1 // loop_exit
      _
    %1188 = vsyncpa [#allocation4], 1
    %s1189 = scalar_lea.sflag [#allocation4], 1
    %1190 = vsyncpa %s1189, 1
    %1191 = vsyncpa [#allocation7], 1
    %1192 = vsyncpa [#allocation10], 1
    %1193 = vsyncpa [#allocation5], 1
    %s1194 = scalar_lea.sflag [#allocation5], 1
    %1195 = vsyncpa %s1194, 1

</llo_original>
